<compile_context>
chip_gen: v5e
topology: v5e:2x2
jax: 0.10.0
libtpu: 0.0.40
codegen_flags: <defaults>
</compile_context>

<pallas_src>
import jax
import jax.numpy as jnp
from jax.experimental import pallas as pl
from jax.experimental.pallas import tpu as pltpu

_LANE = 512                     # lane-dense last dim -> unmasked vst, big DMA rows
_TILE_BYTES = 4 * 1024 * 1024   # per-buffer VMEM budget (4 MiB)
_SMALL_BYTES = 256 * 1024       # below this, plain jnp (kernel overhead dominates)


def _scale_kernel(scale_ref, x_ref, o_ref):
    # scale lives in SMEM as a (1,1) scalar; splat + VPU multiply.
    o_ref[...] = (x_ref[...] * scale_ref[0, 0]).astype(o_ref.dtype)


def _dimension_semantics():
    # v7x has 2 TensorCores per chip, each with its own HBM path: CORE_PARALLEL
    # lets both stream their own slice of the row grid. Plain "parallel"
    # elsewhere (single-TC v5e/v6e; neutral there).
    core_parallel = getattr(pltpu, "CORE_PARALLEL", None)
    try:
        kind = jax.devices()[0].device_kind.lower()
    except Exception:
        kind = ""
    if core_parallel is not None and "v7" in kind:
        return (core_parallel,)
    return ("parallel",)


def _scale_2d(x2d, scale_op, out_dtype):
    """Run the streaming kernel on a lane-dense (rows, _LANE) slab."""
    rows, lane = x2d.shape
    in_item = jnp.dtype(x2d.dtype).itemsize
    out_item = jnp.dtype(out_dtype).itemsize
    max_item = max(in_item, out_item)

    # Byte-budgeted tile rows; multiple of 32 sublane-packs keeps bf16/int8
    # vreg-dense. A single full-extent block for small slabs.
    budget_rows = max(32, (_TILE_BYTES // (lane * max_item)) // 32 * 32)
    tile_rows = rows if rows <= budget_rows else budget_rows
    grid = (pl.cdiv(rows, tile_rows),)

    # Double-buffered in + out footprint, plus headroom for internal scratch.
    need = 2 * tile_rows * lane * (in_item + out_item) + (4 << 20)
    vmem_limit = int(min(max(need, 16 << 20), 48 << 20))

    return pl.pallas_call(
        _scale_kernel,
        out_shape=jax.ShapeDtypeStruct((rows, lane), out_dtype),
        grid_spec=pl.GridSpec(
            grid=grid,
            in_specs=[
                pl.BlockSpec(memory_space=pltpu.MemorySpace.SMEM),   # scale (1,1)
                pl.BlockSpec((tile_rows, lane), lambda i: (i, 0)),   # x tile
            ],
            out_specs=pl.BlockSpec((tile_rows, lane), lambda i: (i, 0)),
        ),
        compiler_params=pltpu.CompilerParams(
            dimension_semantics=_dimension_semantics(),
            vmem_limit_bytes=vmem_limit,
        ),
        cost_estimate=pl.CostEstimate(
            flops=rows * lane,
            transcendentals=0,
            bytes_accessed=rows * lane * (in_item + out_item),
        ),
    )(scale_op, x2d)


def scale_layer(x: jax.Array, scale=1.0, *, force_kernel: bool = False) -> jax.Array:
    """Equivalent of ScaleLayer.forward: returns x * scale."""
    orig_shape = x.shape
    n = x.size
    # Match `input * scale` promotion semantics (incl. int input * float scale).
    out_dtype = jnp.result_type(x, scale)

    if n == 0:
        return (x * scale).astype(out_dtype)

    aligned = (n % _LANE) == 0
    in_bytes_total = n * jnp.dtype(x.dtype).itemsize

    # Fast paths (per perf review): tiny inputs (pallas_call fixed cost dominates
    # and blocks XLA fusion) and ragged sizes (pad/slice copies would ~3x the HBM
    # traffic of a bandwidth-bound op; plain XLA multiply is already at roofline).
    if not force_kernel and (in_bytes_total < _SMALL_BYTES or not aligned):
        return x * scale

    # scale -> SMEM scalar operand (no recompile per value; supports traced arrays).
    smem_dtype = jnp.float32 if jnp.issubdtype(out_dtype, jnp.floating) else jnp.int32
    scale_op = jnp.asarray(scale, dtype=smem_dtype).reshape(1, 1)

    x_flat = jnp.ravel(x)  # free (bitcast) for contiguous inputs

    if aligned:
        rows = n // _LANE
        out2d = _scale_2d(x_flat.reshape(rows, _LANE), scale_op, out_dtype)
        return out2d.reshape(orig_shape)

    # force_kernel on a ragged size: kernel on the 512-aligned prefix, plain jnp
    # on the (<512-element) tail — no full-array jnp.pad / output slice.
    rows = n // _LANE
    if rows == 0:
        return (x * scale).astype(out_dtype)
    split = rows * _LANE
    head = _scale_2d(x_flat[:split].reshape(rows, _LANE), scale_op, out_dtype)
    tail = (x_flat[split:] * scale).astype(out_dtype)
    return jnp.concatenate([head.reshape(-1), tail]).reshape(orig_shape)


if __name__ == "__main__":
    key = jax.random.PRNGKey(0)
    scale = 0.75

    # NCHW activation matching the module's usage: batch=2, channels=4, 16x16.
    x = jax.random.normal(key, (2, 4, 16, 16), dtype=jnp.float32)

    # Kernel path (force past the small-input fast path so the Pallas kernel runs).
    out = jax.block_until_ready(scale_layer(x, scale, force_kernel=True))
    ref = x * scale
    assert out.shape == x.shape and out.dtype == ref.dtype
    assert jnp.allclose(out, ref, atol=1e-6, rtol=1e-6)

    # Default dispatch for a tiny input -> fused jnp fast path.
    out_fast = jax.block_until_ready(scale_layer(x, scale))
    assert jnp.allclose(out_fast, ref, atol=1e-6, rtol=1e-6)

    # Ragged-size input through the kernel path (aligned prefix in-kernel, jnp tail).
    x2 = jax.random.normal(jax.random.PRNGKey(1), (3, 5, 7, 9), dtype=jnp.float32)
    out2 = jax.block_until_ready(scale_layer(x2, scale, force_kernel=True))
    assert out2.shape == x2.shape and out2.dtype == (x2 * scale).dtype
    assert jnp.allclose(out2, x2 * scale, atol=1e-6, rtol=1e-6)

    # Learnable / traced scale (jax.Array) via the SMEM operand — no recompile per value.
    scale_arr = jnp.float32(1.25)
    out3 = jax.block_until_ready(scale_layer(x, scale_arr, force_kernel=True))
    assert jnp.allclose(out3, x * scale_arr, atol=1e-6, rtol=1e-6)

    print("KERNEL_OK")
</pallas_src>

<mosaic_0001>
module attributes {stable_mosaic.version = 11 : i64} {
  func.func @_scale_kernel(%arg0: i32, %arg1: memref<1x1xf32, #tpu.memory_space<smem>>, %arg2: memref<4x512xf32, #tpu.memory_space<vmem>>, %arg3: memref<4x512xf32, #tpu.memory_space<vmem>>) attributes {dimension_semantics = [#tpu.dimension_semantics<parallel>], iteration_bounds = array<i64: 1>, scalar_prefetch = 0 : i64, scratch_operands = 0 : i64, tpu.core_type = #tpu.core_type<tc>, window_params = [{transform_indices = @transform_0, window_bounds = array<i64: 1, 1>}, {transform_indices = @transform_1, window_bounds = array<i64: 4, 512>}, {transform_indices = @transform_2, window_bounds = array<i64: 4, 512>}]} {
    %c0 = arith.constant 0 : index
    %c0_0 = arith.constant 0 : index
    %0 = vector.load %arg2[%c0, %c0_0] : memref<4x512xf32, #tpu.memory_space<vmem>>, vector<4x512xf32>
    %c0_1 = arith.constant 0 : index
    %c0_2 = arith.constant 0 : index
    %1 = memref.load %arg1[%c0_1, %c0_2] : memref<1x1xf32, #tpu.memory_space<smem>>
    %2 = vector.broadcast %1 : f32 to vector<4x512xf32>
    %3 = arith.mulf %0, %2 : vector<4x512xf32>
    %c0_3 = arith.constant 0 : index
    %c0_4 = arith.constant 0 : index
    %4 = vector.load %arg3[%c0_3, %c0_4] : memref<4x512xf32, #tpu.memory_space<vmem>>, vector<4x512xf32>
    tpu.vector_store %arg3[%c0_3, %c0_4], %3 {strides = array<i32>} : memref<4x512xf32, #tpu.memory_space<vmem>>, vector<4x512xf32>,
    return
  }
  func.func @transform_0(%arg0: i32) -> (i32, i32) {
    %c0_i32 = arith.constant 0 : i32
    %c0_i32_0 = arith.constant 0 : i32
    %c0_i32_1 = arith.constant 0 : i32
    return %c0_i32, %c0_i32_0 : i32, i32
  }
  func.func @transform_1(%arg0: i32) -> (i32, i32) {
    %c0_i32 = arith.constant 0 : i32
    %c0_i32_0 = arith.constant 0 : i32
    return %arg0, %c0_i32 : i32, i32
  }
  func.func @transform_2(%arg0: i32) -> (i32, i32) {
    %c0_i32 = arith.constant 0 : i32
    %c0_i32_0 = arith.constant 0 : i32
    return %arg0, %c0_i32 : i32, i32
  }
}

</mosaic_0001>

<llo_original>
// kernel: tpu_custom_call.1
$region0: #{tpu_custom_call.1}
  #allocation0 [shape = 'u32[]', space=smem, size = 0x4, offset = 0x4, fixed_abs, tag = 'smem constant byte address 0x4 - core index']
  #allocation1 [shape = 'u32[72,128]{1,0:T(1,128)}', space=vmem, size = 0x9000, scoped, tag = 'internal scratch']
  #allocation2 [shape = 'f32[1,1]{1,0:T(1,128)S(6)}', space=smem, size = 0x200, scoped, tag = 'scoped memory for tpu_custom_call.1']
  %s0 = inlined_call_operand.<no memory space> [shape: f32[1,1], index: 0, kind: input, shape index: {}]
  %s1 = inlined_call_operand.hbm [shape: f32[4,512], index: 1, kind: input, shape index: {}]
  %s2 = inlined_call_operand.hbm [shape: f32[4,512], index: 2, kind: output, shape index: {}]
  %s3 = sld [smem:[#allocation0]]
  $region22: #{tpu_custom_call.1} parent=0
    _
  %s5 = ssub.s32 1, %s3
  %s6 = scalar_select 0, %s5, %s3
  %7 = sst [smem:[#allocation2]] %s0
  $region1: #{tpu_custom_call.1} parent=0
    #allocation3 [shape = 'u8[8192]{0}', space=vmem, size = 0x2000, scoped, tag = 'input window, operand 1, single buffered']
    #allocation4 [shape = 's32[1]{0}', space=sflag, size = 0x4, scoped, tag = 'scoped memory for tpu_custom_call.1']
    #allocation5 [shape = 's32[1]{0}', space=sflag, size = 0x4, scoped, tag = 'scoped memory for tpu_custom_call.1']
    #allocation6 [shape = 'u8[8192]{0}', space=vmem, size = 0x2000, scoped, tag = 'output window, operand 0, single buffered']
    %8 = vsyncpa [#allocation4], 0
    %9 = vsyncpa [#allocation5], 0
    // Predicated region
    $region2: #{tpu_custom_call.1} parent=1 // pred_check
      _
    $region3: #{tpu_custom_call.1} parent=1 // pred_check_branch
      %11 = sbr.rel (0) target = $region5
    $region4: #{tpu_custom_call.1} parent=1 // pred_region
      _
    $region5: #{tpu_custom_call.1} parent=1 // pred_fallthru
      _
    // Predicated region
    $region6: #{tpu_custom_call.1} parent=1 // pred_check
      _
    $region7: #{tpu_custom_call.1} parent=1 // pred_check_branch
      %13 = sbr.rel (0) target = $region9
    $region8: #{tpu_custom_call.1} parent=1 // pred_region
      %15 = vsyncadd [#allocation4], 0
      %s17 = sshll.u32 %s1, 4
      %s18 = int_to_ptr.hbm [resolvable:$true] %s17
      %s19 = sshll.u32 [#allocation3], 4
      %s20 = int_to_ptr.vmem [resolvable:$true] %s19
      %22 = dma.hbm_to_vmem [thread:$0]  %s18, 256, %s20, [#allocation4]
    $region9: #{tpu_custom_call.1} parent=1 // pred_fallthru
      _
    // Predicated region
    $region10: #{tpu_custom_call.1} parent=1 // pred_check
      _
    $region11: #{tpu_custom_call.1} parent=1 // pred_check_branch
      %24 = sbr.rel (0) target = $region13
    $region12: #{tpu_custom_call.1} parent=1 // pred_region
      %26 = dma.done [#allocation4], 256
    $region13: #{tpu_custom_call.1} parent=1 // pred_fallthru
      _
    %v27 = vld [vmem:[#allocation3] sm:$0xff]
    %v28 = vld [vmem:[#allocation3 + $0x8] sm:$0xff]
    %s29 = sld [smem:[#allocation2]]
    %v30 = vstv %s29
    %v31 = vmul.f32 %v27, %v30
    %v32 = vmul.f32 %v28, %v30
    %33 = vst [vmem:[#allocation6] sm:$0xff] %v31
    %34 = vst [vmem:[#allocation6 + $0x8] sm:$0xff] %v32
    // Predicated region
    $region14: #{tpu_custom_call.1} parent=1 // pred_check
      _
    $region15: #{tpu_custom_call.1} parent=1 // pred_check_branch
      %36 = sbr.rel (0) target = $region17
    $region16: #{tpu_custom_call.1} parent=1 // pred_region
      %38 = vsyncadd [#allocation5], 0
      %s40 = sshll.u32 [#allocation6], 4
      %s41 = int_to_ptr.vmem [resolvable:$true] %s40
      %s42 = sshll.u32 %s2, 4
      %s43 = int_to_ptr.hbm [resolvable:$true] %s42
      %45 = dma.vmem_to_hbm [thread:$0]  %s41, 256, %s43, [#allocation5]
    $region17: #{tpu_custom_call.1} parent=1 // pred_fallthru
      _
    // Predicated region
    $region18: #{tpu_custom_call.1} parent=1 // pred_check
      _
    $region19: #{tpu_custom_call.1} parent=1 // pred_check_branch
      %47 = sbr.rel (0) target = $region21
    $region20: #{tpu_custom_call.1} parent=1 // pred_region
      %49 = dma.done [#allocation5], 256
    $region21: #{tpu_custom_call.1} parent=1 // pred_fallthru
      _
    %50 = vsyncpa [#allocation4], 1
    %51 = vsyncpa [#allocation5], 1

</llo_original>
